<compile_context>
chip_gen: v5e
topology: v5e:2x2
jax: 0.10.0
libtpu: 0.0.40
codegen_flags: <defaults>
</compile_context>

<pallas_src>
import functools

import jax
import jax.numpy as jnp
from jax import lax
from jax.experimental import pallas as pl
from jax.experimental.pallas import tpu as pltpu


LEAK = 1.0 / 3.0   # scn.LeakyReLU() default leakiness
BN_EPS = 1e-4      # scn.BatchNormalization default eps
LANE = 128         # lane width; spatial tile is a multiple of this
SUBLANE = 8        # f32 sublane group; output channels padded to this
TM_MAX = 2048      # max spatial sites per grid step (K/Cout tiny, VMEM cheap)


def _cdiv(a, b):
    return -(-a // b)


def _round_up(x, m):
    return _cdiv(x, m) * m


def _conv_bn_lrelu_kernel(p_ref, w_ref, shift_ref, o_ref):
    # (Cout_pad, K) bf16 @ (K, TM) bf16 on the MXU, f32 accumulation; spatial
    # sites sit on the lane axis so every output lane is real data. The BN
    # scale is pre-folded into the weight; only the per-channel shift remains.
    acc = jnp.dot(w_ref[...], p_ref[...], preferred_element_type=jnp.float32)
    y = acc + shift_ref[...]                     # (Cout_pad, TM) + (Cout_pad, 1)
    # Leaky ReLU as a single VALU max (valid since 0 < LEAK < 1).
    o_ref[...] = jnp.maximum(y, LEAK * y).astype(o_ref.dtype)


def _im2col_t(x, k, s):
    """x: (N, C, H, W) -> patches (N, C*k*k, OH*OW).

    K row order is (C, kh, kw); spatial column order is (oh, ow)."""
    N, C, H, W = x.shape
    OH = (H - k) // s + 1
    OW = (W - k) // s + 1
    if s == k and H % k == 0 and W % k == 0:
        # Pure space-to-depth (the usual downsample case): reshape + transpose.
        p = x.reshape(N, C, OH, k, OW, k).transpose(0, 1, 3, 5, 2, 4)
    else:
        cols = []
        for kh in range(k):
            for kw in range(k):
                cols.append(x[:, :, kh:kh + OH * s:s, kw:kw + OW * s:s])
        p = jnp.stack(cols, axis=2).reshape(N, C, k, k, OH, OW)
    return p.reshape(N, C * k * k, OH * OW), OH, OW


def _choose_tm(ohw, n):
    """Spatial tile width (lane axis): multiple of 128, capped at TM_MAX.

    Aim for >= 4 total grid steps when the problem allows it (v7x: two
    TensorCores each get >= 2 steps so the BlockSpec pipeline can overlap);
    otherwise take the largest lane-dense tile available."""
    ohw128 = _round_up(max(ohw, 1), LANE)
    lane_blocks = ohw128 // LANE
    want_tiles = max(1, _cdiv(4, max(n, 1)))      # enough tiles for >= 4 steps
    min_tiles = _cdiv(ohw128, TM_MAX)             # forced by the TM cap
    tiles = min(lane_blocks, max(want_tiles, min_tiles))
    return _round_up(_cdiv(ohw128, tiles), LANE)


@functools.partial(jax.jit, static_argnames=("kernel", "stride"))
def sparse_conv_downsample(x, weight, bn_scale, bn_shift, *, kernel, stride):
    """Dense-equivalent forward of SparseConvolutionDownsample.

    x:        (N, C, H, W) float32
    weight:   (C*kernel*kernel, Cout) float32 (row order: C, kh, kw)
    bn_scale: (Cout,) = gamma / sqrt(running_var + eps)
    bn_shift: (Cout,) = beta - running_mean * bn_scale
    returns:  (N, Cout, OH, OW) float32 (NCHW, no post-kernel transpose)
    """
    N, C, H, W = x.shape
    K, Cout = weight.shape

    # Transposed GEMM operands: weight (Cout, K) with BN scale folded in,
    # per-channel shift as a (Cout, 1) column. bf16 MXU inputs, f32 accum.
    w_t = (weight.T * bn_scale[:, None]).astype(jnp.bfloat16)      # (Cout, K)
    shift = bn_shift.astype(jnp.float32)[:, None]                  # (Cout, 1)

    # Output channels only need sublane alignment (8), not 128 lanes.
    COP = _round_up(Cout, SUBLANE)
    if COP != Cout:
        w_t = jnp.pad(w_t, ((0, COP - Cout), (0, 0)))
        shift = jnp.pad(shift, ((0, COP - Cout), (0, 0)))

    patches, OH, OW = _im2col_t(x.astype(jnp.bfloat16), kernel, stride)
    OHW = OH * OW

    TM = _choose_tm(OHW, N)
    OHW_pad = _round_up(OHW, TM)
    if OHW_pad != OHW:
        patches = jnp.pad(patches, ((0, 0), (0, 0), (0, OHW_pad - OHW)))
    grid = (N, OHW_pad // TM)

    # VMEM budget: double-buffered in/out tiles + resident weight/shift, with
    # 4x headroom; even at TM_MAX this is well under every chip's VMEM
    # (v7x: 64 MiB physical, 32 MiB scoped default).
    need = 2 * (K * TM * 2 + COP * TM * 4) + COP * K * 2 + COP * 4
    vmem_limit = min(32 * 1024 * 1024, max(4 * 1024 * 1024, 4 * need))

    out = pl.pallas_call(
        _conv_bn_lrelu_kernel,
        out_shape=jax.ShapeDtypeStruct((N, COP, OHW_pad), jnp.float32),
        grid_spec=pltpu.PrefetchScalarGridSpec(
            num_scalar_prefetch=0,
            grid=grid,
            in_specs=[
                pl.BlockSpec((None, K, TM), lambda n, m: (n, 0, m)),
                pl.BlockSpec((COP, K), lambda n, m: (0, 0)),
                pl.BlockSpec((COP, 1), lambda n, m: (0, 0)),
            ],
            out_specs=pl.BlockSpec((None, COP, TM), lambda n, m: (n, 0, m)),
        ),
        compiler_params=pltpu.CompilerParams(
            dimension_semantics=("parallel", "parallel"),
            vmem_limit_bytes=vmem_limit,
            # Let XLA fuse the im2col producer into the pallas_call operand to
            # avoid an extra HBM round-trip for `patches` where possible.
            allow_input_fusion=[True, False, False],
        ),
    )(patches, w_t, shift)

    # Already NCHW up to the (small) channel/spatial padding slice.
    return out[:, :Cout, :OHW].reshape(N, Cout, OH, OW)


def _reference(x, w_oihw, gamma, beta, rmean, rvar, stride):
    """Pure-JAX f32 reference (lax conv -> BN -> leaky relu)."""
    y = lax.conv_general_dilated(
        x, w_oihw, window_strides=(stride, stride), padding="VALID",
        dimension_numbers=("NCHW", "OIHW", "NCHW"))
    scale = gamma / jnp.sqrt(rvar + BN_EPS)
    shift = beta - rmean * scale
    y = y * scale[None, :, None, None] + shift[None, :, None, None]
    return jnp.where(y > 0, y, LEAK * y)


if __name__ == "__main__":
    # Module config: infilters=4, outfilters=8, kernel=2, stride=2,
    # batch_norm=True, activation='leaky', nplanes=1.
    N, C, H, W = 2, 4, 16, 16
    Cout, k, s = 8, 2, 2

    key = jax.random.PRNGKey(0)
    kx, kw = jax.random.split(key)

    x = jax.random.normal(kx, (N, C, H, W), dtype=jnp.float32)

    # Conv weight: dense layout (C, k, k, Cout) flattened to (C*k*k, Cout)
    # to match the im2col row ordering.
    w_dense = jax.random.normal(kw, (C, k, k, Cout), dtype=jnp.float32) * 0.1
    w_mat = w_dense.reshape(C * k * k, Cout)
    w_oihw = jnp.transpose(w_dense, (3, 0, 1, 2))  # for the reference conv

    # Deterministic BatchNorm parameters (inference-style running stats).
    # TODO(synk): scn training-mode BN uses per-batch statistics over active
    # sites; here we implement the inference affine transform.
    gamma = 1.0 + 0.1 * jnp.arange(Cout, dtype=jnp.float32)
    beta = 0.05 * jnp.arange(Cout, dtype=jnp.float32)
    rmean = 0.01 * jnp.arange(Cout, dtype=jnp.float32)
    rvar = 1.0 + 0.02 * jnp.arange(Cout, dtype=jnp.float32)

    bn_scale = gamma / jnp.sqrt(rvar + BN_EPS)
    bn_shift = beta - rmean * bn_scale

    out = sparse_conv_downsample(
        x, w_mat, bn_scale, bn_shift, kernel=k, stride=s)
    out = jax.block_until_ready(out)
    assert out.shape == (N, Cout, H // s, W // s), out.shape

    # Tight check: same bf16 / folded-scale / transposed-GEMM math in plain JAX.
    patches_bf, OH, OW = _im2col_t(x.astype(jnp.bfloat16), k, s)
    w_t = (w_mat.T * bn_scale[:, None]).astype(jnp.bfloat16)
    acc = jnp.einsum("ok,nkm->nom", w_t, patches_bf,
                     preferred_element_type=jnp.float32)
    yy = acc + bn_shift[None, :, None]
    ref_bf16 = jnp.maximum(yy, LEAK * yy).reshape(N, Cout, OH, OW)
    assert jnp.allclose(out, ref_bf16, atol=1e-3, rtol=1e-3), float(
        jnp.max(jnp.abs(out - ref_bf16)))

    # Loose check vs full-f32 module semantics (conv -> BN -> leaky ReLU);
    # tolerance widened for bf16 MXU inputs.
    ref = _reference(x, w_oihw, gamma, beta, rmean, rvar, s)
    assert jnp.allclose(out, ref, atol=5e-2, rtol=5e-2), float(
        jnp.max(jnp.abs(out - ref)))

    print("KERNEL_OK")
</pallas_src>

<mosaic_0001>
module attributes {stable_mosaic.version = 11 : i64} {
  func.func @_conv_bn_lrelu_kernel(%arg0: i32, %arg1: i32, %arg2: memref<1x16x128xbf16, #tpu.memory_space<vmem>>, %arg3: memref<8x16xbf16, #tpu.memory_space<vmem>>, %arg4: memref<8x1xf32, #tpu.memory_space<vmem>>, %arg5: memref<1x8x128xf32, #tpu.memory_space<vmem>>) attributes {dimension_semantics = [#tpu.dimension_semantics<parallel>, #tpu.dimension_semantics<parallel>], iteration_bounds = array<i64: 2, 1>, scalar_prefetch = 0 : i64, scratch_operands = 0 : i64, tpu.core_type = #tpu.core_type<tc>, window_params = [{transform_indices = @transform_0, window_bounds = array<i64: 1, 16, 128>}, {pipeline_mode = #tpu.pipeline_mode<synchronous>, transform_indices = @transform_1, window_bounds = array<i64: 8, 16>}, {pipeline_mode = #tpu.pipeline_mode<synchronous>, transform_indices = @transform_2, window_bounds = array<i64: 8, 1>}, {transform_indices = @transform_3, window_bounds = array<i64: 1, 8, 128>}]} {
    %c0 = arith.constant 0 : index
    %c0_0 = arith.constant 0 : index
    %0 = vector.load %arg3[%c0, %c0_0] : memref<8x16xbf16, #tpu.memory_space<vmem>>, vector<8x16xbf16>
    %c0_1 = arith.constant 0 : index
    %c0_2 = arith.constant 0 : index
    %c0_3 = arith.constant 0 : index
    %1 = vector.load %arg2[%c0_1, %c0_2, %c0_3] : memref<1x16x128xbf16, #tpu.memory_space<vmem>>, vector<1x16x128xbf16>
    %2 = vector.shape_cast %1 : vector<1x16x128xbf16> to vector<16x128xbf16>
    %cst = arith.constant dense<0.000000e+00> : vector<8x128xf32>
    %3 = tpu.matmul %0, %2, %cst {dimension_numbers = #tpu.dot_dimension_numbers<[1], [0], [0], [1], [0, 0, 1, 1], [], []>} : vector<8x16xbf16>, vector<16x128xbf16>, vector<8x128xf32> -> vector<8x128xf32>
    %c0_4 = arith.constant 0 : index
    %c0_5 = arith.constant 0 : index
    %4 = vector.load %arg4[%c0_4, %c0_5] : memref<8x1xf32, #tpu.memory_space<vmem>>, vector<8x1xf32>
    %5 = vector.broadcast %4 : vector<8x1xf32> to vector<8x128xf32>
    %6 = arith.addf %3, %5 : vector<8x128xf32>
    %cst_6 = arith.constant 0.333333343 : f32
    %7 = vector.broadcast %cst_6 : f32 to vector<8x128xf32>
    %8 = arith.mulf %7, %6 : vector<8x128xf32>
    %9 = arith.maximumf %6, %8 : vector<8x128xf32>
    %c0_7 = arith.constant 0 : index
    %c0_8 = arith.constant 0 : index
    %c0_9 = arith.constant 0 : index
    %10 = vector.load %arg5[%c0_7, %c0_8, %c0_9] : memref<1x8x128xf32, #tpu.memory_space<vmem>>, vector<1x8x128xf32>
    %11 = vector.shape_cast %10 : vector<1x8x128xf32> to vector<8x128xf32>
    %12 = vector.shape_cast %9 : vector<8x128xf32> to vector<1x8x128xf32>
    tpu.vector_store %arg5[%c0_7, %c0_8, %c0_9], %12 {strides = array<i32>} : memref<1x8x128xf32, #tpu.memory_space<vmem>>, vector<1x8x128xf32>,
    return
  }
  func.func @transform_0(%arg0: i32, %arg1: i32) -> (i32, i32, i32) {
    %c0_i32 = arith.constant 0 : i32
    %c0_i32_0 = arith.constant 0 : i32
    return %arg0, %c0_i32, %arg1 : i32, i32, i32
  }
  func.func @transform_1(%arg0: i32, %arg1: i32) -> (i32, i32) {
    %c0_i32 = arith.constant 0 : i32
    %c0_i32_0 = arith.constant 0 : i32
    %c0_i32_1 = arith.constant 0 : i32
    return %c0_i32, %c0_i32_0 : i32, i32
  }
  func.func @transform_2(%arg0: i32, %arg1: i32) -> (i32, i32) {
    %c0_i32 = arith.constant 0 : i32
    %c0_i32_0 = arith.constant 0 : i32
    %c0_i32_1 = arith.constant 0 : i32
    return %c0_i32, %c0_i32_0 : i32, i32
  }
  func.func @transform_3(%arg0: i32, %arg1: i32) -> (i32, i32, i32) {
    %c0_i32 = arith.constant 0 : i32
    %c0_i32_0 = arith.constant 0 : i32
    return %arg0, %c0_i32, %arg1 : i32, i32, i32
  }
}

</mosaic_0001>

<llo_original>
// kernel: sparse_conv_downsample.2
$region0: #{sparse_conv_downsample.2}
  #allocation0 [shape = 'u32[]', space=smem, size = 0x4, offset = 0x4, fixed_abs, tag = 'smem constant byte address 0x4 - core index']
  #allocation1 [shape = 'u32[72,128]{1,0:T(1,128)}', space=vmem, size = 0x9000, scoped, tag = 'internal scratch']
  #allocation2 [shape = 'u32[2048]{0}', space=vmem, size = 0x2000, scoped, tag = 'scoped memory for sparse_conv_downsample.2']
  #allocation3 [shape = 'u32[2048]{0}', space=vmem, size = 0x2000, scoped, tag = 'scoped memory for sparse_conv_downsample.2']
  #allocation4 [shape = 'u32[2048]{0}', space=vmem, size = 0x2000, scoped, tag = 'scoped memory for sparse_conv_downsample.2']
  #allocation5 [shape = 'u32[2048]{0}', space=vmem, size = 0x2000, scoped, tag = 'scoped memory for sparse_conv_downsample.2']
  #allocation6 [shape = 'u32[2048]{0}', space=vmem, size = 0x2000, scoped, tag = 'scoped memory for sparse_conv_downsample.2']
  %s0 = inlined_call_operand.vmem [shape: bf16[8,16], index: 0, kind: input, shape index: {}]
  %s1 = inlined_call_operand.vmem [shape: f32[8,1], index: 1, kind: input, shape index: {}]
  %s2 = inlined_call_operand.vmem [shape: bf16[2,16,64], index: 2, kind: input, shape index: {}]
  %s3 = inlined_call_operand.<no memory space> [shape: bf16[], index: 3, kind: input, shape index: {}]
  %s4 = inlined_call_operand.vmem [shape: f32[2,8,128], index: 4, kind: output, shape index: {}]
  %s5 = sld [smem:[#allocation0]]
  $region45: #{sparse_conv_downsample.2} parent=0
    _
  %s7 = ssub.s32 1, %s5
  %s8 = scalar_select 0, %s7, %s5
  %v9 = vstv %s3
  %v10 = vunpack.i.l.bf16 %v9
  %v12 = vunpack.i.h.bf16 %v9
  loop: start=0, step=1, limit=4
  $region2: #{sparse_conv_downsample.2} parent=0 // loop_pre_header
    _
  $region3: #{sparse_conv_downsample.2} parent=0 // loop_header
    %s15 = sphi 0, %s19
    %p16 = scmp.ge.s32.totalorder %s15, 4
    %s22 = sphi 0, %s34
    %s23 = sphi 0, %s30
    %s24 = sphi 0, %s22
    %s25 = sphi 0, %s23
    %s26 = sphi 0, %s24
    %s27 = sphi 0, %s25
    %s39 = sphi 0, %s41
    %s42 = sphi 0, %s39
    %s43 = sphi 0, %s42
    %s59 = sphi 0, %s43
    %s63 = sphi 0, %s63
    %s65 = sphi 0, %s63
    %s66 = sphi 0, %s65
    %s80 = sphi 0, %s66
    %s84 = sphi 0, %s84
    %s86 = sphi 0, %s84
    %s87 = sphi 0, %s86
    %s101 = sphi 0, %s87
    %s109 = sphi 0, %s111
    %s112 = sphi 0, %s109
    %s113 = sphi 0, %s112
    %s129 = sphi 0, %s113
  $region4: #{sparse_conv_downsample.2} parent=0 // loop_header_branch
    %18 = sbr.rel (%p16) target = $region8
  $region5: #{sparse_conv_downsample.2} parent=0 // loop_body
    %s20 = ssub.s32 %s15, 1
    %s21 = ssub.s32 %s15, 2
    %s28 = sadd.s32 1, %s23
    %p29 = scmp.ge.s32.totalorder %s28, 1
    %s30 = scalar_select %p29, 0, %s28
    %s31 = sadd.s32 1, %s22
    %s32 = scalar_select %p29, %s31, %s22
    %p33 = scmp.ge.s32.totalorder %s32, 2
    %s34 = scalar_select %p33, 0, %s32
    %s35 = ssub.s32 %s22, %s34
    %s36 = ssub.s32 %s23, %s30
    %s37 = sor.u32 %s35, %s36
    %p38 = scmp.eq.s32.totalorder %s37, 0
    %s40 = sadd.s32 %s39, 1
    %s41 = scalar_select %p38, %s39, %s40
    %p44 = pneg %p38
    %p45 = scmp.eq.s32.totalorder %s15, 1
    %p46 = por %p44, %p45
    %p47 = scmp.ne.s32.totalorder %s39, %s42
    %p48 = scmp.eq.s32.totalorder %s15, 0
    %p49 = por %p47, %p48
    %p50 = scmp.ne.s32.totalorder %s39, %s42
    %p51 = scmp.eq.s32.totalorder %s20, 1
    %p52 = por %p50, %p51
    %p53 = scmp.ne.s32.totalorder %s42, %s43
    %p54 = scmp.eq.s32.totalorder %s20, 0
    %p55 = por %p53, %p54
    %p56 = scmp.ne.s32.totalorder %s42, %s43
    %p57 = scmp.eq.s32.totalorder %s21, 1
    %p58 = por %p56, %p57
    %p60 = scmp.ne.s32.totalorder %s43, %s59
    %p61 = scmp.eq.s32.totalorder %s21, 0
    %p62 = por %p60, %p61
    %s64 = sadd.s32 %s63, 1
    %p67 = scmp.eq.s32.totalorder %s15, 1
    %p68 = scmp.ne.s32.totalorder %s63, %s65
    %p69 = scmp.eq.s32.totalorder %s15, 0
    %p70 = por %p68, %p69
    %p71 = scmp.ne.s32.totalorder %s63, %s65
    %p72 = scmp.eq.s32.totalorder %s20, 1
    %p73 = por %p71, %p72
    %p74 = scmp.ne.s32.totalorder %s65, %s66
    %p75 = scmp.eq.s32.totalorder %s20, 0
    %p76 = por %p74, %p75
    %p77 = scmp.ne.s32.totalorder %s65, %s66
    %p78 = scmp.eq.s32.totalorder %s21, 1
    %p79 = por %p77, %p78
    %p81 = scmp.ne.s32.totalorder %s66, %s80
    %p82 = scmp.eq.s32.totalorder %s21, 0
    %p83 = por %p81, %p82
    %s85 = sadd.s32 %s84, 1
    %p88 = scmp.eq.s32.totalorder %s15, 1
    %p89 = scmp.ne.s32.totalorder %s84, %s86
    %p90 = scmp.eq.s32.totalorder %s15, 0
    %p91 = por %p89, %p90
    %p92 = scmp.ne.s32.totalorder %s84, %s86
    %p93 = scmp.eq.s32.totalorder %s20, 1
    %p94 = por %p92, %p93
    %p95 = scmp.ne.s32.totalorder %s86, %s87
    %p96 = scmp.eq.s32.totalorder %s20, 0
    %p97 = por %p95, %p96
    %p98 = scmp.ne.s32.totalorder %s86, %s87
    %p99 = scmp.eq.s32.totalorder %s21, 1
    %p100 = por %p98, %p99
    %p102 = scmp.ne.s32.totalorder %s87, %s101
    %p103 = scmp.eq.s32.totalorder %s21, 0
    %p104 = por %p102, %p103
    %s105 = ssub.s32 %s22, %s34
    %s106 = ssub.s32 %s23, %s30
    %s107 = sor.u32 %s105, %s106
    %p108 = scmp.eq.s32.totalorder %s107, 0
    %s110 = sadd.s32 %s109, 1
    %s111 = scalar_select %p108, %s109, %s110
    %p114 = pneg %p108
    %p115 = scmp.eq.s32.totalorder %s15, 1
    %p116 = por %p114, %p115
    %p117 = scmp.ne.s32.totalorder %s109, %s112
    %p118 = scmp.eq.s32.totalorder %s15, 0
    %p119 = por %p117, %p118
    %p120 = scmp.ne.s32.totalorder %s109, %s112
    %p121 = scmp.eq.s32.totalorder %s20, 1
    %p122 = por %p120, %p121
    %p123 = scmp.ne.s32.totalorder %s112, %s113
    %p124 = scmp.eq.s32.totalorder %s20, 0
    %p125 = por %p123, %p124
    %p126 = scmp.ne.s32.totalorder %s112, %s113
    %p127 = scmp.eq.s32.totalorder %s21, 1
    %p128 = por %p126, %p127
    %p130 = scmp.ne.s32.totalorder %s113, %s129
    %p131 = scmp.eq.s32.totalorder %s21, 0
    %p132 = por %p130, %p131
    %p133 = scmp.le.s32.totalorder 1, %s15
    %p134 = scmp.lt.s32.totalorder %s15, 3
    %p135 = pnand %p133, %p134
    %p136 = pneg %p135
    // Predicated region
    $region9: #{sparse_conv_downsample.2} parent=5 // pred_check
      _
    $region10: #{sparse_conv_downsample.2} parent=5 // pred_check_branch
      %138 = sbr.rel (%p135) target = $region12
    $region11: #{sparse_conv_downsample.2} parent=5 // pred_region
      %s139 = ssub.s32 %s15, 1
      // Predicated region
      $region13: #{sparse_conv_downsample.2} parent=11 // pred_check
        %p140 = pneg %p76
      $region14: #{sparse_conv_downsample.2} parent=11 // pred_check_branch
        %142 = sbr.rel (%p140) target = $region16
      $region15: #{sparse_conv_downsample.2} parent=11 // pred_region
        _
      $region16: #{sparse_conv_downsample.2} parent=11 // pred_fallthru
        _
      // Predicated region
      $region17: #{sparse_conv_downsample.2} parent=11 // pred_check
        %p143 = pneg %p97
      $region18: #{sparse_conv_downsample.2} parent=11 // pred_check_branch
        %145 = sbr.rel (%p143) target = $region20
      $region19: #{sparse_conv_downsample.2} parent=11 // pred_region
        _
      $region20: #{sparse_conv_downsample.2} parent=11 // pred_fallthru
        _
    $region12: #{sparse_conv_downsample.2} parent=5 // pred_fallthru
      _
    %p146 = scmp.lt.s32.totalorder %s15, 2
    // Predicated region
    $region21: #{sparse_conv_downsample.2} parent=5 // pred_check
      %p147 = pneg %p146
    $region22: #{sparse_conv_downsample.2} parent=5 // pred_check_branch
      %149 = sbr.rel (%p147) target = $region24
    $region23: #{sparse_conv_downsample.2} parent=5 // pred_region
      // Predicated region
      $region25: #{sparse_conv_downsample.2} parent=23 // pred_check
        %p150 = pneg %p49
      $region26: #{sparse_conv_downsample.2} parent=23 // pred_check_branch
        %152 = sbr.rel (%p150) target = $region28
      $region27: #{sparse_conv_downsample.2} parent=23 // pred_region
        %s153 = ssub.s32 1, %s23
        %s154 = smul.u32 8, %s153
        %p155 = scmp.lt.s32.totalorder %s22, 1
        %s156 = scalar_select %p155, %s22, 1
        %p157 = scmp.lt.s32.totalorder %s23, 0
        %s158 = scalar_select %p157, %s23, 0
        %s159 = smul.addr %s156, 2
        %s160 = sadd.s32 %s158, %s159
        %s161 = smul.addr %s160, 4
        %s162 = scalar_lea.vmem %s2, %s161
        %s163 = ssub.s32 1, %s23
        %s164 = smul.u32 8, %s163
      $region28: #{sparse_conv_downsample.2} parent=23 // pred_fallthru
        _
    $region24: #{sparse_conv_downsample.2} parent=5 // pred_fallthru
      _
    %p165 = scmp.le.s32.totalorder 1, %s15
    %p166 = scmp.lt.s32.totalorder %s15, 3
    %p167 = pnand %p165, %p166
    %p168 = pneg %p167
    // Predicated region
    $region29: #{sparse_conv_downsample.2} parent=5 // pred_check
      _
    $region30: #{sparse_conv_downsample.2} parent=5 // pred_check_branch
      %170 = sbr.rel (%p167) target = $region32
    $region31: #{sparse_conv_downsample.2} parent=5 // pred_region
      #allocation7 [shape = 'u8[4096]{0}', space=vmem, size = 0x1000, dematerialized = true, scoped, tag = 'FusionAdapter Buffer %fusion.1 = bf16[2,16,128]{2,1,0:T(8,128)(2,1)} fusion(%param_2.1, %param_3), kind=kLoop, calls=%fused_computation.1.clone, metadata={op_name="jit(sparse_conv_downsample)/jit(_pad)/pad" stack_frame_id=15}']
      %s171 = ssub.s32 %s15, 1
      %s172 = ssub.s32 1, %s25
      %s173 = smul.u32 8, %s172
      %p174 = scmp.lt.s32.totalorder %s24, 1
      %s175 = scalar_select %p174, %s24, 1
      %p176 = scmp.lt.s32.totalorder %s25, 0
      %s177 = scalar_select %p176, %s25, 0
      %s178 = smul.addr %s175, 2
      %s179 = sadd.s32 %s177, %s178
      %s180 = smul.addr %s179, 4
      %s181 = scalar_lea.vmem %s2, %s180
      %p182 = pneg %p55
      %p183 = pneg %p52
      %p184 = pneg %p76
      %p185 = pneg %p73
      %p186 = pneg %p97
      %p187 = pneg %p94
      %p188 = pneg %p125
      %p189 = pneg %p122
      %p190 = scmp.lt.s32.totalorder %s24, 1
      %s191 = scalar_select %p190, %s24, 1
      %p192 = scmp.lt.s32.totalorder %s25, 0
      %s193 = scalar_select %p192, %s25, 0
      %s194 = sadd.s32 %s193, %s191
      %s195 = smul.addr %s194, 8
      %s196 = scalar_lea.vmem %s4, %s195
      %s197 = ssub.s32 1, %s25
      %s198 = smul.u32 8, %s197
      %p199 = scmp.lt.s32.totalorder %s24, 1
      %s200 = scalar_select %p199, %s24, 1
      %p201 = scmp.lt.s32.totalorder %s25, 0
      %s202 = scalar_select %p201, %s25, 0
      %s203 = smul.addr %s200, 2
      %s204 = sadd.s32 %s202, %s203
      %s205 = smul.addr %s204, 4
      %s206 = scalar_lea.vmem %s2, %s205
      %s207 = ssub.s32 1, %s25
      %s208 = smul.u32 8, %s207
      %p209 = scmp.lt.s32.totalorder %s24, 1
      %s210 = scalar_select %p209, %s24, 1
      %p211 = scmp.lt.s32.totalorder %s25, 0
      %s212 = scalar_select %p211, %s25, 0
      %s213 = sadd.s32 %s212, %s210
      %s214 = smul.addr %s213, 8
      %s215 = scalar_lea.vmem %s4, %s214
      %s216 = ssub.s32 0, %s25
      %p217 = scmp.lt.s32.totalorder %s216, 0
      %s218 = scalar_select %p217, 0, 255
      %s219 = sshrl.u32 %s218, 1
      %s220 = sor.u32 %s218, %s219
      %s221 = sand.u32 %s220, 85
      %s222 = sshrl.u32 %s221, 1
      %s223 = sor.u32 %s221, %s222
      %s224 = sand.u32 51, %s223
      %s225 = sshrl.u32 %s224, 2
      %s226 = sor.u32 %s224, %s225
      %s227 = sand.u32 15, %s226
      %v228 = vld [vmem:[%s206] sm:%s227]
      %v229 = vunpack.c.l.bf16 %v228
      %v230 = vunpack.c.h.bf16 %v228
      %s231 = ssub.s32 0, %s25
      %v232 = vstv %s231
      %vm233 = vcmp.lt.s32.totalorder %v232, 0
      %v234 = vsel %vm233, %v10, %v229
      %s235 = smul.addr %s25, 128
      %v236 = vlaneseq
      %v237 = vand.u32 %v236, 127
      %v238 = vstv %s235
      %v239 = vadd.s32 %v237, %v238
      %vm240 = vcmp.lt.s32.totalorder %v239, 64
      %v241 = vsel %vm240, %v234, %v10
      %v242 = vpack.c.bf16 0.0, %v241
      %s244 = ssub.s32 16, 1
      %245 = vst [vmem:[#allocation7] sm:%s244] %v242
      %s246 = scalar_lea.vmem %s206, 4
      %s247 = ssub.s32 0, %s25
      %p248 = scmp.lt.s32.totalorder %s247, 0
      %s249 = scalar_select %p248, 0, 255
      %s250 = sshrl.u32 %s249, 1
      %s251 = sor.u32 %s249, %s250
      %s252 = sand.u32 %s251, 85
      %s253 = sshrl.u32 %s252, 1
      %s254 = sor.u32 %s252, %s253
      %s255 = sand.u32 51, %s254
      %s256 = sshrl.u32 %s255, 2
      %s257 = sor.u32 %s255, %s256
      %s258 = sand.u32 15, %s257
      %v259 = vld [vmem:[%s246] sm:%s258]
      %v260 = vunpack.c.l.bf16 %v259
      %v261 = vunpack.c.h.bf16 %v259
      %s262 = ssub.s32 0, %s25
      %v263 = vstv %s262
      %vm264 = vcmp.lt.s32.totalorder %v263, 0
      %v265 = vsel %vm264, %v10, %v260
      %s266 = smul.addr %s25, 128
      %v267 = vlaneseq
      %v268 = vand.u32 %v267, 127
      %v269 = vstv %s266
      %v270 = vadd.s32 %v268, %v269
      %vm271 = vcmp.lt.s32.totalorder %v270, 64
      %v272 = vsel %vm271, %v265, %v10
      %s273 = scalar_lea.vmem [#allocation7], 4
      %v274 = vpack.c.bf16 0.0, %v272
      %s276 = ssub.s32 16, 1
      %277 = vst [vmem:[%s273] sm:%s276] %v274
      %v279 = vld [vmem:[%s0] sm:$0xf]
      %v280 = vld [vmem:[#allocation7] sm:$0xf]
      %v281 = vld [vmem:[#allocation7 + $0x4] sm:$0xf]
      %v282 = vld [vmem:[%s1] sm:$0xff]
      %284 = vset.pattern.permute.xlu0 0
      %285 = vperm.xlu0 %284, %v282
      %v286 = vpop.permute.xlu0 %285
      %v290 = vunpack.c.l.b16 %v280
      %v291 = vunpack.c.l.b16 %v281
      %v292 = vpack.c.b16 %v291, %v290
      %vm294 = vcmask 130048
      %v296 = vsel %vm294, %v279, 0
      %298 = vmatpush.bf16.msra.mxu0 0
      %299 = vmatpush.bf16.msra.mxu0 0
      %300 = vmatpush.bf16.msra.mxu0 0
      %301 = vmatpush.bf16.msra.mxu0 0
      %302 = vmatpush.bf16.msra.mxu0 0
      %303 = vmatpush.bf16.msra.mxu0 0
      %304 = vmatpush.bf16.msra.mxu0 0
      %305 = vmatpush.bf16.msra.mxu0 %v292
      %306 = vmatmul.bf16.gmra.mxu0 %v296
      %v307 = vpop.f32.mrf.mxu0
      %v308 = vadd.f32 %v286, %v307
      %v309 = vpop.f32.mrf.mxu0
      %310 = vdwg.mxu0
      %v311 = vmul.f32 %v308, 0.33333334
      %v312 = vmax.f32 %v308, %v311
      %313 = vst [vmem:[%s215] sm:$0xff] %v312
      %p314 = scmp.lt.s32.totalorder %s24, 1
      %s315 = scalar_select %p314, %s24, 1
      %p316 = scmp.lt.s32.totalorder %s25, 0
      %s317 = scalar_select %p316, %s25, 0
      %s318 = sadd.s32 %s317, %s315
      %s319 = smul.addr %s318, 8
      %s320 = scalar_lea.vmem %s4, %s319
      // Predicated region
      $region33: #{sparse_conv_downsample.2} parent=31 // pred_check
        %p321 = pneg %p122
      $region34: #{sparse_conv_downsample.2} parent=31 // pred_check_branch
        %323 = sbr.rel (%p321) target = $region36
      $region35: #{sparse_conv_downsample.2} parent=31 // pred_region
        _
      $region36: #{sparse_conv_downsample.2} parent=31 // pred_fallthru
        _
    $region32: #{sparse_conv_downsample.2} parent=5 // pred_fallthru
      _
    %p324 = scmp.le.s32.totalorder 2, %s15
    // Predicated region
    $region37: #{sparse_conv_downsample.2} parent=5 // pred_check
      %p325 = pneg %p324
    $region38: #{sparse_conv_downsample.2} parent=5 // pred_check_branch
      %327 = sbr.rel (%p325) target = $region40
    $region39: #{sparse_conv_downsample.2} parent=5 // pred_region
      %s328 = ssub.s32 %s15, 2
      // Predicated region
      $region41: #{sparse_conv_downsample.2} parent=39 // pred_check
        %p329 = pneg %p128
      $region42: #{sparse_conv_downsample.2} parent=39 // pred_check_branch
        %331 = sbr.rel (%p329) target = $region44
      $region43: #{sparse_conv_downsample.2} parent=39 // pred_region
        %p332 = scmp.lt.s32.totalorder %s26, 1
        %s333 = scalar_select %p332, %s26, 1
        %p334 = scmp.lt.s32.totalorder %s27, 0
        %s335 = scalar_select %p334, %s27, 0
        %s336 = sadd.s32 %s335, %s333
        %s337 = smul.addr %s336, 8
        %s338 = scalar_lea.vmem %s4, %s337
      $region44: #{sparse_conv_downsample.2} parent=39 // pred_fallthru
        _
    $region40: #{sparse_conv_downsample.2} parent=5 // pred_fallthru
      _
  $region6: #{sparse_conv_downsample.2} parent=0 // loop_footer
    %s19 = sadd.s32 1, %s15
  $region7: #{sparse_conv_downsample.2} parent=0 // loop_footer_branch
    %14 = sbr.rel target = $region3
  $region8: #{sparse_conv_downsample.2} parent=0 // loop_exit
    _

</llo_original>
